<compile_context>
chip_gen: v6e
topology: v6e:2x2x1
jax: 0.10.0
libtpu: 0.0.40
codegen_flags: <defaults>
</compile_context>

<pallas_src>
import functools
import math

import jax
import jax.numpy as jnp
from jax.experimental import pallas as pl
from jax.experimental.pallas import tpu as pltpu


def _round_up(x, m):
    return (x + m - 1) // m * m


def _cdiv(a, b):
    return (a + b - 1) // b


def _ohem_stats_kernel(logits_ref, labels_ref, *rest, thresh_val, hw, sub,
                       has_weight):
    """Per-tile (count, sum) of hard (loss > thresh) weighted CE losses.

    logits_ref: (C, BP)  model dtype (bf16/f32), class on sublanes, pixels on lanes
    labels_ref: (1, BP)  int32
    weight_ref: (C, 1)   f32 class weights (only if has_weight)
    stats_ref:  (8, 128) f32; rows 0-3 broadcast hard-count, rows 4-7 hard-sum
    """
    if has_weight:
        weight_ref, stats_ref = rest
        weight = weight_ref[...]                                  # (C, 1)
    else:
        (stats_ref,) = rest
        weight = None

    c, bp = logits_ref.shape
    num_chunks = bp // sub
    tile_base = pl.program_id(1) * bp

    def chunk(j, carry):
        cnt, ssum = carry
        start = pl.multiple_of(j * sub, sub)
        logits = logits_ref[:, pl.ds(start, sub)].astype(jnp.float32)  # (C, sub)
        labels = labels_ref[:, pl.ds(start, sub)]                      # (1, sub)

        onehot = jax.lax.broadcasted_iota(jnp.int32, (c, sub), 0) == labels

        # Numerically stable logsumexp over the class (sublane) axis.
        m = jnp.max(logits, axis=0, keepdims=True)                     # (1, sub)
        lse = m + jnp.log(jnp.sum(jnp.exp(logits - m), axis=0, keepdims=True))

        # Fused: loss = sum_c onehot * w_c * (lse - logit_c) = w_y*(lse - logit_y)
        nll = lse - logits                                             # (C, sub)
        if has_weight:
            nll = nll * weight
        loss = jnp.sum(jnp.where(onehot, nll, 0.0), axis=0, keepdims=True)

        # Mask the padded tail of the last tile (garbage VMEM / OOB pixels).
        pix = tile_base + start + jax.lax.broadcasted_iota(
            jnp.int32, (1, sub), 1)
        valid = pix < hw
        hard = jnp.logical_and(valid, loss > thresh_val)
        cnt = cnt + jnp.sum(jnp.where(hard, 1.0, 0.0))
        ssum = ssum + jnp.sum(jnp.where(hard, loss, 0.0))
        return cnt, ssum

    cnt, ssum = jax.lax.fori_loop(
        0, num_chunks, chunk, (jnp.float32(0.0), jnp.float32(0.0)))

    row = jax.lax.broadcasted_iota(jnp.int32, (8, 128), 0)
    stats_ref[...] = jnp.where(row < 4, cnt, ssum)


@functools.partial(jax.jit,
                   static_argnames=("thresh", "block_pixels", "sub_pixels"))
def ohem_ce_loss(logits_nchw, labels_nhw, thresh, weight=None,
                 block_pixels=16384, sub_pixels=2048):
    """Matches OhemCELoss.forward: per-pixel CE, keep losses > -log(thresh);
    if fewer than numel//16 such pixels, use the top numel//16 losses; mean."""
    N, C, H, W = logits_nchw.shape
    HW = H * W
    P = N * HW
    n_min = P // 16
    thresh_val = float(-math.log(thresh))

    # Free, contiguous reshapes only — no transpose / pad of the big tensor.
    logits_ncp = logits_nchw.reshape(N, C, HW)
    labels_n1p = labels_nhw.reshape(N, 1, HW).astype(jnp.int32)

    # Tile geometry: `sub` lane-dense chunks (multiple of 128) inside a large
    # per-grid-step block `bp` (amortizes step overhead; temps bounded by sub).
    sub = max(128, min(sub_pixels, _round_up(HW, 128)))
    sub = _round_up(sub, 128)
    bp = max(sub, min(block_pixels, _round_up(HW, sub)))
    bp = _round_up(bp, sub)
    num_tiles = _cdiv(HW, bp)

    has_weight = weight is not None
    kernel = functools.partial(
        _ohem_stats_kernel, thresh_val=thresh_val, hw=HW, sub=sub,
        has_weight=has_weight)

    in_specs = [
        pl.BlockSpec((None, C, bp), lambda n, i: (n, 0, i)),
        pl.BlockSpec((None, 1, bp), lambda n, i: (n, 0, i)),
    ]
    args = [logits_ncp, labels_n1p]
    if has_weight:
        weight_c1 = jnp.asarray(weight, jnp.float32).reshape(C, 1)
        in_specs.append(pl.BlockSpec((C, 1), lambda n, i: (0, 0)))
        args.append(weight_c1)

    stats = pl.pallas_call(
        kernel,
        out_shape=jax.ShapeDtypeStruct((N * num_tiles * 8, 128), jnp.float32),
        grid=(N, num_tiles),
        in_specs=in_specs,
        out_specs=pl.BlockSpec((8, 128), lambda n, i: (n * num_tiles + i, 0)),
        compiler_params=pltpu.CompilerParams(
            dimension_semantics=("parallel", "parallel"),
            vmem_limit_bytes=32 * 1024 * 1024),
    )(*args)

    stats3 = stats.reshape(N * num_tiles, 8, 128)
    # Per-tile counts are exact in f32 (tile size << 2^24); accumulate as int32
    # so the count < n_min branch decision stays exact for huge inputs.
    count = jnp.sum(stats3[:, 0, 0].astype(jnp.int32))
    sum_above = jnp.sum(stats3[:, 4, 0])
    mean_above = sum_above / jnp.maximum(count.astype(jnp.float32), 1.0)

    # TODO(synk): top_k has no clean Pallas equivalent; the rare fallback
    # recomputes per-pixel CE in plain JAX (f32) and sorts there, gated behind
    # lax.cond so it only executes when count < n_min.
    def topk_branch(_):
        logits_pc = (jnp.swapaxes(logits_ncp, 1, 2)
                     .reshape(P, C).astype(jnp.float32))
        labels_p = labels_n1p.reshape(P)
        logp = jax.nn.log_softmax(logits_pc, axis=-1)
        ce = -jnp.take_along_axis(logp, labels_p[:, None], axis=-1)[:, 0]
        if has_weight:
            ce = ce * jnp.asarray(weight, jnp.float32)[labels_p]
        return jnp.mean(jax.lax.top_k(ce, n_min)[0])

    def hard_branch(_):
        return mean_above

    return jax.lax.cond(count < n_min, topk_branch, hard_branch, 0)


def _reference_ohem(logits_nchw, labels_nhw, thresh, weight=None):
    """Pure-JAX reference mirroring the PyTorch module."""
    N, C, H, W = logits_nchw.shape
    P = N * H * W
    logits = jnp.transpose(logits_nchw, (0, 2, 3, 1)).reshape(P, C).astype(jnp.float32)
    labels = labels_nhw.reshape(P).astype(jnp.int32)
    logp = jax.nn.log_softmax(logits, axis=-1)
    ce = -jnp.take_along_axis(logp, labels[:, None], axis=-1)[:, 0]
    if weight is not None:
        ce = ce * jnp.asarray(weight, jnp.float32)[labels]
    thresh_val = -jnp.log(jnp.float32(thresh))
    n_min = P // 16
    mask = ce > thresh_val
    count = jnp.sum(mask.astype(jnp.int32))
    mean_above = jnp.sum(jnp.where(mask, ce, 0.0)) / jnp.maximum(
        count.astype(jnp.float32), 1.0)
    mean_topk = jnp.mean(jax.lax.top_k(ce, n_min)[0])
    return jnp.where(count < n_min, mean_topk, mean_above)


if __name__ == "__main__":
    key = jax.random.PRNGKey(0)
    k_logits, k_labels = jax.random.split(key)

    N, C, H, W = 2, 4, 16, 16
    logits = jax.random.normal(k_logits, (N, C, H, W), dtype=jnp.float32)
    labels = jax.random.randint(k_labels, (N, H, W), 0, C, dtype=jnp.int32)
    class_weight = jnp.linspace(0.5, 1.5, C, dtype=jnp.float32)

    # Common path: many pixels above -log(0.7).
    out = ohem_ce_loss(logits, labels, 0.7, weight=class_weight)
    jax.block_until_ready(out)
    ref = _reference_ohem(logits, labels, 0.7, weight=class_weight)
    assert jnp.allclose(out, ref, rtol=1e-5, atol=1e-5), (out, ref)

    # Fallback path: huge threshold (-log(1e-6)) -> count < n_min -> top_k.
    out_tk = ohem_ce_loss(logits, labels, 1e-6, weight=class_weight)
    jax.block_until_ready(out_tk)
    ref_tk = _reference_ohem(logits, labels, 1e-6, weight=class_weight)
    assert jnp.allclose(out_tk, ref_tk, rtol=1e-5, atol=1e-5), (out_tk, ref_tk)

    # weight=None path (specialized kernel without the weight operand).
    out_nw = ohem_ce_loss(logits, labels, 0.7)
    jax.block_until_ready(out_nw)
    ref_nw = _reference_ohem(logits, labels, 0.7)
    assert jnp.allclose(out_nw, ref_nw, rtol=1e-5, atol=1e-5), (out_nw, ref_nw)

    # bf16 logits stay bf16 in HBM; cast happens inside the kernel.
    logits_bf16 = logits.astype(jnp.bfloat16)
    out_bf = ohem_ce_loss(logits_bf16, labels, 0.7, weight=class_weight)
    jax.block_until_ready(out_bf)
    ref_bf = _reference_ohem(logits_bf16, labels, 0.7, weight=class_weight)
    assert jnp.allclose(out_bf, ref_bf, rtol=1e-3, atol=1e-3), (out_bf, ref_bf)

    # Ragged tail / multi-chunk path: H*W not a multiple of the tile width.
    H2, W2 = 20, 30
    logits2 = jax.random.normal(k_logits, (N, C, H2, W2), dtype=jnp.float32)
    labels2 = jax.random.randint(k_labels, (N, H2, W2), 0, C, dtype=jnp.int32)
    out2 = ohem_ce_loss(logits2, labels2, 0.7, weight=class_weight,
                        block_pixels=512, sub_pixels=128)
    jax.block_until_ready(out2)
    ref2 = _reference_ohem(logits2, labels2, 0.7, weight=class_weight)
    assert jnp.allclose(out2, ref2, rtol=1e-5, atol=1e-5), (out2, ref2)

    print("KERNEL_OK")
</pallas_src>

<mosaic_0001>
module attributes {stable_mosaic.version = 11 : i64} {
  func.func @_ohem_stats_kernel(%arg0: i32, %arg1: i32, %arg2: memref<1x4x256xf32, #tpu.memory_space<vmem>>, %arg3: memref<1x1x256xi32, #tpu.memory_space<vmem>>, %arg4: memref<4x1xf32, #tpu.memory_space<vmem>>, %arg5: memref<8x128xf32, #tpu.memory_space<vmem>>) attributes {dimension_semantics = [#tpu.dimension_semantics<parallel>, #tpu.dimension_semantics<parallel>], iteration_bounds = array<i64: 2, 1>, scalar_prefetch = 0 : i64, scratch_operands = 0 : i64, tpu.core_type = #tpu.core_type<tc>, window_params = [{transform_indices = @transform_0, window_bounds = array<i64: 1, 4, 256>}, {transform_indices = @transform_1, window_bounds = array<i64: 1, 1, 256>}, {pipeline_mode = #tpu.pipeline_mode<synchronous>, transform_indices = @transform_2, window_bounds = array<i64: 4, 1>}, {transform_indices = @transform_3, window_bounds = array<i64: 8, 128>}]} {
    %c0 = arith.constant 0 : index
    %c0_0 = arith.constant 0 : index
    %0 = vector.load %arg4[%c0, %c0_0] : memref<4x1xf32, #tpu.memory_space<vmem>>, vector<4x1xf32>
    %c256_i32 = arith.constant 256 : i32
    %1 = arith.muli %arg1, %c256_i32 : i32
    %cst = arith.constant 0.000000e+00 : f32
    %cst_1 = arith.constant 0.000000e+00 : f32
    %c0_i32 = arith.constant 0 : i32
    %c256_i32_2 = arith.constant 256 : i32
    %2 = arith.muli %c0_i32, %c256_i32_2 : i32
    %3 = tpu.assume_multiple %2, 256 : i32
    %c0_3 = arith.constant 0 : index
    %c0_4 = arith.constant 0 : index
    %4 = arith.index_cast %3 : i32 to index
    %5 = vector.load %arg2[%c0_3, %c0_4, %4] : memref<1x4x256xf32, #tpu.memory_space<vmem>>, vector<1x4x256xf32>
    %6 = vector.shape_cast %5 : vector<1x4x256xf32> to vector<4x256xf32>
    %c0_5 = arith.constant 0 : index
    %c0_6 = arith.constant 0 : index
    %7 = arith.index_cast %3 : i32 to index
    %8 = vector.load %arg3[%c0_5, %c0_6, %7] : memref<1x1x256xi32, #tpu.memory_space<vmem>>, vector<1x1x256xi32>
    %9 = vector.shape_cast %8 : vector<1x1x256xi32> to vector<1x256xi32>
    %10 = tpu.iota {dimensions = array<i32: 0>} : vector<4x256xi32>
    %11 = vector.broadcast %9 : vector<1x256xi32> to vector<4x256xi32>
    %12 = arith.cmpi eq, %10, %11 : vector<4x256xi32>
    %cst_7 = arith.constant dense<0xFF800000> : vector<256xf32>
    %13 = vector.multi_reduction <maximumf>, %6, %cst_7 [0] : vector<4x256xf32> to vector<256xf32>
    %14 = vector.shape_cast %13 : vector<256xf32> to vector<1x256xf32>
    %15 = vector.broadcast %14 : vector<1x256xf32> to vector<4x256xf32>
    %16 = arith.subf %6, %15 : vector<4x256xf32>
    %17 = math.exp %16 : vector<4x256xf32>
    %cst_8 = arith.constant dense<0.000000e+00> : vector<256xf32>
    %18 = vector.multi_reduction <add>, %17, %cst_8 [0] : vector<4x256xf32> to vector<256xf32>
    %19 = vector.shape_cast %18 : vector<256xf32> to vector<1x256xf32>
    %20 = math.log %19 : vector<1x256xf32>
    %21 = arith.addf %14, %20 : vector<1x256xf32>
    %22 = vector.broadcast %21 : vector<1x256xf32> to vector<4x256xf32>
    %23 = arith.subf %22, %6 : vector<4x256xf32>
    %24 = vector.broadcast %0 : vector<4x1xf32> to vector<4x256xf32>
    %25 = arith.mulf %23, %24 : vector<4x256xf32>
    %cst_9 = arith.constant 0.000000e+00 : f32
    %26 = vector.broadcast %cst_9 : f32 to vector<4x256xf32>
    %27 = arith.select %12, %25, %26 : vector<4x256xi1>, vector<4x256xf32>
    %cst_10 = arith.constant dense<0.000000e+00> : vector<256xf32>
    %28 = vector.multi_reduction <add>, %27, %cst_10 [0] : vector<4x256xf32> to vector<256xf32>
    %29 = vector.shape_cast %28 : vector<256xf32> to vector<1x256xf32>
    %30 = arith.addi %1, %3 : i32
    %31 = tpu.iota {dimensions = array<i32: 1>} : vector<1x256xi32>
    %32 = vector.broadcast %30 : i32 to vector<1x256xi32>
    %33 = arith.addi %32, %31 : vector<1x256xi32>
    %c256_i32_11 = arith.constant 256 : i32
    %34 = vector.broadcast %c256_i32_11 : i32 to vector<1x256xi32>
    %35 = arith.cmpi slt, %33, %34 : vector<1x256xi32>
    %cst_12 = arith.constant 0.356674939 : f32
    %36 = vector.broadcast %cst_12 : f32 to vector<1x256xf32>
    %37 = arith.cmpf ogt, %29, %36 : vector<1x256xf32>
    %38 = arith.andi %35, %37 : vector<1x256xi1>
    %cst_13 = arith.constant 1.000000e+00 : f32
    %cst_14 = arith.constant 0.000000e+00 : f32
    %39 = vector.broadcast %cst_13 : f32 to vector<1x256xf32>
    %40 = vector.broadcast %cst_14 : f32 to vector<1x256xf32>
    %41 = arith.select %38, %39, %40 : vector<1x256xi1>, vector<1x256xf32>
    %42 = vector.shape_cast %41 : vector<1x256xf32> to vector<1x1x256xf32>
    %cst_15 = arith.constant dense<0.000000e+00> : vector<1xf32>
    %43 = vector.multi_reduction <add>, %42, %cst_15 [1, 2] : vector<1x1x256xf32> to vector<1xf32>
    %44 = vector.shape_cast %43 : vector<1xf32> to vector<1x1x1xf32>
    %45 = vector.extract %44[0, 0, 0] : f32 from vector<1x1x1xf32>
    %46 = arith.addf %cst, %45 : f32
    %cst_16 = arith.constant 0.000000e+00 : f32
    %47 = vector.broadcast %cst_16 : f32 to vector<1x256xf32>
    %48 = arith.select %38, %29, %47 : vector<1x256xi1>, vector<1x256xf32>
    %49 = vector.shape_cast %48 : vector<1x256xf32> to vector<1x1x256xf32>
    %cst_17 = arith.constant dense<0.000000e+00> : vector<1xf32>
    %50 = vector.multi_reduction <add>, %49, %cst_17 [1, 2] : vector<1x1x256xf32> to vector<1xf32>
    %51 = vector.shape_cast %50 : vector<1xf32> to vector<1x1x1xf32>
    %52 = vector.extract %51[0, 0, 0] : f32 from vector<1x1x1xf32>
    %53 = arith.addf %cst_1, %52 : f32
    %c1_i32 = arith.constant 1 : i32
    %54 = tpu.iota {dimensions = array<i32: 0>} : vector<8x128xi32>
    %c4_i32 = arith.constant 4 : i32
    %55 = vector.broadcast %c4_i32 : i32 to vector<8x128xi32>
    %56 = arith.cmpi slt, %54, %55 : vector<8x128xi32>
    %57 = vector.broadcast %46 : f32 to vector<8x128xf32>
    %58 = vector.broadcast %53 : f32 to vector<8x128xf32>
    %59 = arith.select %56, %57, %58 : vector<8x128xi1>, vector<8x128xf32>
    %c0_18 = arith.constant 0 : index
    %c0_19 = arith.constant 0 : index
    %60 = vector.load %arg5[%c0_18, %c0_19] : memref<8x128xf32, #tpu.memory_space<vmem>>, vector<8x128xf32>
    tpu.vector_store %arg5[%c0_18, %c0_19], %59 {strides = array<i32>} : memref<8x128xf32, #tpu.memory_space<vmem>>, vector<8x128xf32>,
    return
  }
  func.func @transform_0(%arg0: i32, %arg1: i32) -> (i32, i32, i32) {
    %c0_i32 = arith.constant 0 : i32
    %c0_i32_0 = arith.constant 0 : i32
    return %arg0, %c0_i32, %arg1 : i32, i32, i32
  }
  func.func @transform_1(%arg0: i32, %arg1: i32) -> (i32, i32, i32) {
    %c0_i32 = arith.constant 0 : i32
    %c0_i32_0 = arith.constant 0 : i32
    return %arg0, %c0_i32, %arg1 : i32, i32, i32
  }
  func.func @transform_2(%arg0: i32, %arg1: i32) -> (i32, i32) {
    %c0_i32 = arith.constant 0 : i32
    %c0_i32_0 = arith.constant 0 : i32
    %c0_i32_1 = arith.constant 0 : i32
    return %c0_i32, %c0_i32_0 : i32, i32
  }
  func.func @transform_3(%arg0: i32, %arg1: i32) -> (i32, i32) {
    %c1_i32 = arith.constant 1 : i32
    %0 = arith.muli %arg0, %c1_i32 : i32
    %1 = arith.addi %0, %arg1 : i32
    %c0_i32 = arith.constant 0 : i32
    %c0_i32_0 = arith.constant 0 : i32
    return %1, %c0_i32 : i32, i32
  }
}

</mosaic_0001>

<llo_original>
// kernel: ohem_ce_loss.1
$region0: #{ohem_ce_loss.1}
  #allocation0 [shape = 'u32[]', space=smem, size = 0x4, offset = 0x4, fixed_abs, tag = 'smem constant byte address 0x4 - core index']
  #allocation1 [shape = 'u32[144,128]{1,0:T(1,128)}', space=vmem, size = 0x12000, scoped, tag = 'internal scratch']
  %s0 = inlined_call_operand.vmem [shape: f32[2,4,256], index: 0, kind: input, shape index: {}]
  %s1 = inlined_call_operand.vmem [shape: s32[2,1,256], index: 1, kind: input, shape index: {}]
  %s2 = inlined_call_operand.vmem [shape: f32[4,1], index: 2, kind: input, shape index: {}]
  %s3 = inlined_call_operand.vmem [shape: f32[16,128], index: 3, kind: output, shape index: {}]
  %s4 = sld [smem:[#allocation0]]
  $region45: #{ohem_ce_loss.1} parent=0
    _
  %s6 = ssub.s32 1, %s4
  %s7 = scalar_select 0, %s6, %s4
  loop: start=0, step=1, limit=4
  $region2: #{ohem_ce_loss.1} parent=0 // loop_pre_header
    _
  $region3: #{ohem_ce_loss.1} parent=0 // loop_header
    %s9 = sphi 0, %s13
    %p10 = scmp.ge.s32.totalorder %s9, 4
    %s16 = sphi 0, %s28
    %s17 = sphi 0, %s24
    %s18 = sphi 0, %s16
    %s19 = sphi 0, %s17
    %s20 = sphi 0, %s18
    %s21 = sphi 0, %s19
    %s33 = sphi 0, %s35
    %s36 = sphi 0, %s33
    %s37 = sphi 0, %s36
    %s53 = sphi 0, %s37
    %s61 = sphi 0, %s63
    %s64 = sphi 0, %s61
    %s65 = sphi 0, %s64
    %s81 = sphi 0, %s65
    %s85 = sphi 0, %s85
    %s87 = sphi 0, %s85
    %s88 = sphi 0, %s87
    %s102 = sphi 0, %s88
    %s110 = sphi 0, %s112
    %s113 = sphi 0, %s110
    %s114 = sphi 0, %s113
    %s130 = sphi 0, %s114
  $region4: #{ohem_ce_loss.1} parent=0 // loop_header_branch
    %12 = sbr.rel (%p10) target = $region8
  $region5: #{ohem_ce_loss.1} parent=0 // loop_body
    %s14 = ssub.s32 %s9, 1
    %s15 = ssub.s32 %s9, 2
    %s22 = sadd.s32 1, %s17
    %p23 = scmp.ge.s32.totalorder %s22, 1
    %s24 = scalar_select %p23, 0, %s22
    %s25 = sadd.s32 1, %s16
    %s26 = scalar_select %p23, %s25, %s16
    %p27 = scmp.ge.s32.totalorder %s26, 2
    %s28 = scalar_select %p27, 0, %s26
    %s29 = ssub.s32 %s16, %s28
    %s30 = ssub.s32 %s17, %s24
    %s31 = sor.u32 %s29, %s30
    %p32 = scmp.eq.s32.totalorder %s31, 0
    %s34 = sadd.s32 %s33, 1
    %s35 = scalar_select %p32, %s33, %s34
    %p38 = pneg %p32
    %p39 = scmp.eq.s32.totalorder %s9, 1
    %p40 = por %p38, %p39
    %p41 = scmp.ne.s32.totalorder %s33, %s36
    %p42 = scmp.eq.s32.totalorder %s9, 0
    %p43 = por %p41, %p42
    %p44 = scmp.ne.s32.totalorder %s33, %s36
    %p45 = scmp.eq.s32.totalorder %s14, 1
    %p46 = por %p44, %p45
    %p47 = scmp.ne.s32.totalorder %s36, %s37
    %p48 = scmp.eq.s32.totalorder %s14, 0
    %p49 = por %p47, %p48
    %p50 = scmp.ne.s32.totalorder %s36, %s37
    %p51 = scmp.eq.s32.totalorder %s15, 1
    %p52 = por %p50, %p51
    %p54 = scmp.ne.s32.totalorder %s37, %s53
    %p55 = scmp.eq.s32.totalorder %s15, 0
    %p56 = por %p54, %p55
    %s57 = ssub.s32 %s16, %s28
    %s58 = ssub.s32 %s17, %s24
    %s59 = sor.u32 %s57, %s58
    %p60 = scmp.eq.s32.totalorder %s59, 0
    %s62 = sadd.s32 %s61, 1
    %s63 = scalar_select %p60, %s61, %s62
    %p66 = pneg %p60
    %p67 = scmp.eq.s32.totalorder %s9, 1
    %p68 = por %p66, %p67
    %p69 = scmp.ne.s32.totalorder %s61, %s64
    %p70 = scmp.eq.s32.totalorder %s9, 0
    %p71 = por %p69, %p70
    %p72 = scmp.ne.s32.totalorder %s61, %s64
    %p73 = scmp.eq.s32.totalorder %s14, 1
    %p74 = por %p72, %p73
    %p75 = scmp.ne.s32.totalorder %s64, %s65
    %p76 = scmp.eq.s32.totalorder %s14, 0
    %p77 = por %p75, %p76
    %p78 = scmp.ne.s32.totalorder %s64, %s65
    %p79 = scmp.eq.s32.totalorder %s15, 1
    %p80 = por %p78, %p79
    %p82 = scmp.ne.s32.totalorder %s65, %s81
    %p83 = scmp.eq.s32.totalorder %s15, 0
    %p84 = por %p82, %p83
    %s86 = sadd.s32 %s85, 1
    %p89 = scmp.eq.s32.totalorder %s9, 1
    %p90 = scmp.ne.s32.totalorder %s85, %s87
    %p91 = scmp.eq.s32.totalorder %s9, 0
    %p92 = por %p90, %p91
    %p93 = scmp.ne.s32.totalorder %s85, %s87
    %p94 = scmp.eq.s32.totalorder %s14, 1
    %p95 = por %p93, %p94
    %p96 = scmp.ne.s32.totalorder %s87, %s88
    %p97 = scmp.eq.s32.totalorder %s14, 0
    %p98 = por %p96, %p97
    %p99 = scmp.ne.s32.totalorder %s87, %s88
    %p100 = scmp.eq.s32.totalorder %s15, 1
    %p101 = por %p99, %p100
    %p103 = scmp.ne.s32.totalorder %s88, %s102
    %p104 = scmp.eq.s32.totalorder %s15, 0
    %p105 = por %p103, %p104
    %s106 = sadd.s32 %s16, %s17
    %s107 = sadd.s32 %s28, %s24
    %s108 = ssub.s32 %s106, %s107
    %p109 = scmp.eq.s32.totalorder %s108, 0
    %s111 = sadd.s32 %s110, 1
    %s112 = scalar_select %p109, %s110, %s111
    %p115 = pneg %p109
    %p116 = scmp.eq.s32.totalorder %s9, 1
    %p117 = por %p115, %p116
    %p118 = scmp.ne.s32.totalorder %s110, %s113
    %p119 = scmp.eq.s32.totalorder %s9, 0
    %p120 = por %p118, %p119
    %p121 = scmp.ne.s32.totalorder %s110, %s113
    %p122 = scmp.eq.s32.totalorder %s14, 1
    %p123 = por %p121, %p122
    %p124 = scmp.ne.s32.totalorder %s113, %s114
    %p125 = scmp.eq.s32.totalorder %s14, 0
    %p126 = por %p124, %p125
    %p127 = scmp.ne.s32.totalorder %s113, %s114
    %p128 = scmp.eq.s32.totalorder %s15, 1
    %p129 = por %p127, %p128
    %p131 = scmp.ne.s32.totalorder %s114, %s130
    %p132 = scmp.eq.s32.totalorder %s15, 0
    %p133 = por %p131, %p132
    %p134 = scmp.le.s32.totalorder 1, %s9
    %p135 = scmp.lt.s32.totalorder %s9, 3
    %p136 = pnand %p134, %p135
    %p137 = pneg %p136
    // Predicated region
    $region9: #{ohem_ce_loss.1} parent=5 // pred_check
      _
    $region10: #{ohem_ce_loss.1} parent=5 // pred_check_branch
      %139 = sbr.rel (%p136) target = $region12
    $region11: #{ohem_ce_loss.1} parent=5 // pred_region
      %s140 = ssub.s32 %s9, 1
      // Predicated region
      $region13: #{ohem_ce_loss.1} parent=11 // pred_check
        %p141 = pneg %p98
      $region14: #{ohem_ce_loss.1} parent=11 // pred_check_branch
        %143 = sbr.rel (%p141) target = $region16
      $region15: #{ohem_ce_loss.1} parent=11 // pred_region
        _
      $region16: #{ohem_ce_loss.1} parent=11 // pred_fallthru
        _
    $region12: #{ohem_ce_loss.1} parent=5 // pred_fallthru
      _
    %p144 = scmp.lt.s32.totalorder %s9, 2
    // Predicated region
    $region17: #{ohem_ce_loss.1} parent=5 // pred_check
      %p145 = pneg %p144
    $region18: #{ohem_ce_loss.1} parent=5 // pred_check_branch
      %147 = sbr.rel (%p145) target = $region20
    $region19: #{ohem_ce_loss.1} parent=5 // pred_region
      // Predicated region
      $region21: #{ohem_ce_loss.1} parent=19 // pred_check
        %p148 = pneg %p43
      $region22: #{ohem_ce_loss.1} parent=19 // pred_check_branch
        %150 = sbr.rel (%p148) target = $region24
      $region23: #{ohem_ce_loss.1} parent=19 // pred_region
        %s151 = smul.u32 2, %s17
        %p152 = scmp.lt.s32.totalorder %s16, 1
        %s153 = scalar_select %p152, %s16, 1
        %p154 = scmp.lt.s32.totalorder %s151, 1
        %s155 = scalar_select %p154, %s151, 1
        %s156 = smul.addr %s153, 2
        %s157 = sadd.s32 %s155, %s156
        %s158 = smul.addr %s157, 4
        %s159 = scalar_lea.vmem %s0, %s158
        %s160 = smul.u32 2, %s17
      $region24: #{ohem_ce_loss.1} parent=19 // pred_fallthru
        _
      // Predicated region
      $region25: #{ohem_ce_loss.1} parent=19 // pred_check
        %p161 = pneg %p71
      $region26: #{ohem_ce_loss.1} parent=19 // pred_check_branch
        %163 = sbr.rel (%p161) target = $region28
      $region27: #{ohem_ce_loss.1} parent=19 // pred_region
        %s164 = smul.u32 2, %s17
        %p165 = scmp.lt.s32.totalorder %s16, 1
        %s166 = scalar_select %p165, %s16, 1
        %p167 = scmp.lt.s32.totalorder %s164, 1
        %s168 = scalar_select %p167, %s164, 1
        %s169 = smul.addr %s166, 2
        %s170 = sadd.s32 %s168, %s169
        %s171 = scalar_lea.vmem %s1, %s170
        %s172 = smul.u32 2, %s17
      $region28: #{ohem_ce_loss.1} parent=19 // pred_fallthru
        _
    $region20: #{ohem_ce_loss.1} parent=5 // pred_fallthru
      _
    %p173 = scmp.le.s32.totalorder 1, %s9
    %p174 = scmp.lt.s32.totalorder %s9, 3
    %p175 = pnand %p173, %p174
    %p176 = pneg %p175
    // Predicated region
    $region29: #{ohem_ce_loss.1} parent=5 // pred_check
      _
    $region30: #{ohem_ce_loss.1} parent=5 // pred_check_branch
      %178 = sbr.rel (%p175) target = $region32
    $region31: #{ohem_ce_loss.1} parent=5 // pred_region
      %s179 = ssub.s32 %s9, 1
      %s180 = smul.u32 2, %s19
      %p181 = scmp.lt.s32.totalorder %s18, 1
      %s182 = scalar_select %p181, %s18, 1
      %p183 = scmp.lt.s32.totalorder %s180, 1
      %s184 = scalar_select %p183, %s180, 1
      %s185 = smul.addr %s182, 2
      %s186 = sadd.s32 %s184, %s185
      %s187 = smul.addr %s186, 4
      %s188 = scalar_lea.vmem %s0, %s187
      %p189 = pneg %p49
      %p190 = pneg %p46
      %s191 = smul.u32 2, %s19
      %p192 = scmp.lt.s32.totalorder %s18, 1
      %s193 = scalar_select %p192, %s18, 1
      %p194 = scmp.lt.s32.totalorder %s191, 1
      %s195 = scalar_select %p194, %s191, 1
      %s196 = smul.addr %s193, 2
      %s197 = sadd.s32 %s195, %s196
      %s198 = scalar_lea.vmem %s1, %s197
      %p199 = pneg %p77
      %p200 = pneg %p74
      %p201 = pneg %p98
      %p202 = pneg %p95
      %p203 = pneg %p126
      %p204 = pneg %p123
      %s205 = sadd.s32 %s18, %s19
      %p206 = scmp.lt.s32.totalorder %s205, 1
      %s207 = scalar_select %p206, %s205, 1
      %s208 = smul.addr %s207, 8
      %s209 = scalar_lea.vmem %s3, %s208
      %s210 = smul.u32 2, %s19
      %p211 = scmp.lt.s32.totalorder %s18, 1
      %s212 = scalar_select %p211, %s18, 1
      %p213 = scmp.lt.s32.totalorder %s210, 1
      %s214 = scalar_select %p213, %s210, 1
      %s215 = smul.addr %s212, 2
      %s216 = sadd.s32 %s214, %s215
      %s217 = smul.addr %s216, 4
      %s218 = scalar_lea.vmem %s0, %s217
      %s219 = smul.u32 2, %s19
      %s220 = smul.u32 2, %s19
      %p221 = scmp.lt.s32.totalorder %s18, 1
      %s222 = scalar_select %p221, %s18, 1
      %p223 = scmp.lt.s32.totalorder %s220, 1
      %s224 = scalar_select %p223, %s220, 1
      %s225 = smul.addr %s222, 2
      %s226 = sadd.s32 %s224, %s225
      %s227 = scalar_lea.vmem %s1, %s226
      %s228 = smul.u32 2, %s19
      %s229 = sadd.s32 %s18, %s19
      %p230 = scmp.lt.s32.totalorder %s229, 1
      %s231 = scalar_select %p230, %s229, 1
      %s232 = smul.addr %s231, 8
      %s233 = scalar_lea.vmem %s3, %s232
      %s234 = sadd.s32 %s18, %s19
      %v235 = vld [vmem:[%s2] sm:$0xf]
      %s236 = smul.u32 %s19, 256
      %v237 = vld [vmem:[%s218] sm:$0xff]
      %v238 = vld [vmem:[%s227] sm:$0x3]
      %v239 = vlaneseq
      %v240 = vshrl.u32 %v239, 7
      %v241 = vlaneseq
      %v242 = vshrl.u32 %v241, 7
      %v243 = vsub.s32 0, %v242
      %v244 = vrot.slane %v238, %v243
      %v245 = vlaneseq
      %v246 = vshrl.u32 %v245, 7
      %v247 = vsub.s32 1, %v246
      %v248 = vrot.slane %v238, %v247
      %vm249 = vcmp.eq.s32.totalorder %v240, %v244
      %vm250 = vcmp.eq.s32.totalorder %v240, %v248
      %v252 = vcombine.high %v237, %v237
      %vm254 = vcmask 1043456
      %v255 = vsel %vm254, %v237, -inf
      %v256 = vrot.slane %v255, 4
      %v257 = vmax.f32 %v255, %v256
      %v258 = vrot.slane %v257, 2
      %v259 = vmax.f32 %v257, %v258
      %v260 = vrot.slane %v259, 1
      %v261 = vmax.f32 %v259, %v260
      %v262 = vsel %vm254, %v252, -inf
      %v263 = vrot.slane %v262, 4
      %v264 = vmax.f32 %v262, %v263
      %v265 = vrot.slane %v264, 2
      %v266 = vmax.f32 %v264, %v265
      %v267 = vrot.slane %v266, 1
      %v268 = vmax.f32 %v266, %v267
      %v271 = vcombine.low %v261, %v268
      %v273 = vsub.f32 %v237, %v271
      %v274 = vmul.f32 %v273, 1.442695
      %v275 = vpow.pop %v274
      %v277 = vcombine.high %v275, %v275
      %v279 = vsel %vm254, %v275, 0.0
      %v280 = vrot.slane %v279, 4
      %v281 = vadd.f32 %v279, %v280
      %v282 = vrot.slane %v281, 2
      %v283 = vadd.f32 %v281, %v282
      %v284 = vrot.slane %v283, 1
      %v285 = vadd.f32 %v283, %v284
      %v286 = vsel %vm254, %v277, 0.0
      %v287 = vrot.slane %v286, 4
      %v288 = vadd.f32 %v286, %v287
      %v289 = vrot.slane %v288, 2
      %v290 = vadd.f32 %v288, %v289
      %v291 = vrot.slane %v290, 1
      %v292 = vadd.f32 %v290, %v291
      %v293 = vlog2.pop %v285
      %v294 = vmul.f32 %v293, 0.6931472
      %v295 = vlog2.pop %v292
      %v296 = vmul.f32 %v295, 0.6931472
      %v297 = vadd.f32 %v261, %v294
      %v298 = vadd.f32 %v268, %v296
      %v299 = vsub.f32 %v297, %v237
      %v300 = vsub.f32 %v298, %v252
      %302 = vset.pattern.permute.xlu0 0
      %303 = vperm.xlu0 %302, %v235
      %v304 = vpop.permute.xlu0 %303
      %v306 = vmul.f32 %v299, %v304
      %v307 = vmul.f32 %v300, %v304
      %v308 = vsel %vm249, %v306, 0.0
      %v309 = vsel %vm250, %v307, 0.0
      %v310 = vsel %vm254, %v308, 0.0
      %v311 = vrot.slane %v310, 4
      %v312 = vadd.f32 %v310, %v311
      %v313 = vrot.slane %v312, 2
      %v314 = vadd.f32 %v312, %v313
      %v315 = vrot.slane %v314, 1
      %v316 = vadd.f32 %v314, %v315
      %v317 = vsel %vm254, %v309, 0.0
      %v318 = vrot.slane %v317, 4
      %v319 = vadd.f32 %v317, %v318
      %v320 = vrot.slane %v319, 2
      %v321 = vadd.f32 %v319, %v320
      %v322 = vrot.slane %v321, 1
      %v323 = vadd.f32 %v321, %v322
      %s324 = sadd.s32 %s236, 0
      %v325 = vlaneseq
      %v326 = vand.u32 %v325, 127
      %v327 = vadd.s32 %v326, 128
      %v328 = vstv %s324
      %v329 = vadd.s32 %v328, %v326
      %v330 = vadd.s32 %v328, %v327
      %vm331 = vcmp.lt.s32.totalorder %v329, 256
      %vm332 = vcmp.lt.s32.totalorder %v330, 256
      %vm333 = vcmp.gt.f32.partialorder %v316, 0.35667494
      %vm334 = vcmp.gt.f32.partialorder %v323, 0.35667494
      %vm335 = vmand %vm331, %vm333
      %vm336 = vmand %vm332, %vm334
      %v337 = vsel %vm335, 1.0, 0.0
      %v338 = vsel %vm336, 1.0, 0.0
      %vm339 = vcmask 1040384
      %v340 = vsel %vm339, %v337, 0.0
      %v341 = vsel %vm339, %v338, 0.0
      %v342 = vadd.f32 %v340, %v341
      %343 = vadd.xlane.f32.xlu0 %v342
      %v344 = vpop.xlane.xlu0 %343
      %v345 = vrot.slane %v344, 4
      %v346 = vadd.f32 %v344, %v345
      %v347 = vrot.slane %v346, 2
      %v348 = vadd.f32 %v346, %v347
      %v349 = vrot.slane %v348, 1
      %v350 = vadd.f32 %v348, %v349
      %s351 = vtos %v350
      %s352 = sadd.f32 %s351, 0.0
      %v353 = vsel %vm335, %v316, 0.0
      %v354 = vsel %vm336, %v323, 0.0
      %v355 = vsel %vm339, %v353, 0.0
      %v356 = vsel %vm339, %v354, 0.0
      %v357 = vadd.f32 %v355, %v356
      %358 = vadd.xlane.f32.xlu0 %v357
      %v359 = vpop.xlane.xlu0 %358
      %v360 = vrot.slane %v359, 4
      %v361 = vadd.f32 %v359, %v360
      %v362 = vrot.slane %v361, 2
      %v363 = vadd.f32 %v361, %v362
      %v364 = vrot.slane %v363, 1
      %v365 = vadd.f32 %v363, %v364
      %s366 = vtos %v365
      %s367 = sadd.f32 %s366, 0.0
      %vm368 = vcmp.lt.s32.totalorder %v240, 4
      %v369 = vstv %s352
      %v370 = vstv %s367
      %v371 = vsel %vm368, %v369, %v370
      %372 = vst [vmem:[%s233] sm:$0xff] %v371
      %s373 = sadd.s32 %s18, %s19
      %p374 = scmp.lt.s32.totalorder %s373, 1
      %s375 = scalar_select %p374, %s373, 1
      %s376 = smul.addr %s375, 8
      %s377 = scalar_lea.vmem %s3, %s376
      // Predicated region
      $region33: #{ohem_ce_loss.1} parent=31 // pred_check
        %p378 = pneg %p123
      $region34: #{ohem_ce_loss.1} parent=31 // pred_check_branch
        %380 = sbr.rel (%p378) target = $region36
      $region35: #{ohem_ce_loss.1} parent=31 // pred_region
        %s381 = sadd.s32 %s18, %s19
      $region36: #{ohem_ce_loss.1} parent=31 // pred_fallthru
        _
    $region32: #{ohem_ce_loss.1} parent=5 // pred_fallthru
      _
    %p382 = scmp.le.s32.totalorder 2, %s9
    // Predicated region
    $region37: #{ohem_ce_loss.1} parent=5 // pred_check
      %p383 = pneg %p382
    $region38: #{ohem_ce_loss.1} parent=5 // pred_check_branch
      %385 = sbr.rel (%p383) target = $region40
    $region39: #{ohem_ce_loss.1} parent=5 // pred_region
      %s386 = ssub.s32 %s9, 2
      // Predicated region
      $region41: #{ohem_ce_loss.1} parent=39 // pred_check
        %p387 = pneg %p129
      $region42: #{ohem_ce_loss.1} parent=39 // pred_check_branch
        %389 = sbr.rel (%p387) target = $region44
      $region43: #{ohem_ce_loss.1} parent=39 // pred_region
        %s390 = sadd.s32 %s20, %s21
        %p391 = scmp.lt.s32.totalorder %s390, 1
        %s392 = scalar_select %p391, %s390, 1
        %s393 = smul.addr %s392, 8
        %s394 = scalar_lea.vmem %s3, %s393
      $region44: #{ohem_ce_loss.1} parent=39 // pred_fallthru
        _
    $region40: #{ohem_ce_loss.1} parent=5 // pred_fallthru
      _
  $region6: #{ohem_ce_loss.1} parent=0 // loop_footer
    %s13 = sadd.s32 1, %s9
  $region7: #{ohem_ce_loss.1} parent=0 // loop_footer_branch
    %8 = sbr.rel target = $region3
  $region8: #{ohem_ce_loss.1} parent=0 // loop_exit
    _

</llo_original>
